<compile_context>
chip_gen: v5e
topology: v5e:2x2
jax: 0.10.0
libtpu: 0.0.40
codegen_flags: <defaults>
</compile_context>

<pallas_src>
import math
import numpy as np
import jax
import jax.numpy as jnp
from jax import lax
from jax.experimental import pallas as pl
from jax.experimental.pallas import tpu as pltpu


# ------------------------------------------------------------------
# Kernel: one grid step == (batch b, head h)
# ------------------------------------------------------------------
def _make_fused_attention_kernel(H, use_bf16_mxu, output_attention):
    def kernel(q_ref, k_ref, v_ref,
               wq_ref, bq_ref, wk_ref, bk_ref, wv_ref, bv_ref, wo_ref, bo_ref,
               *rest):
        if output_attention:
            o_ref, a_ref, acc_ref = rest
        else:
            o_ref, acc_ref = rest
            a_ref = None

        h = pl.program_id(1)

        # ---- per-head projections (softmax scale already folded into wq/bq) ----
        # Each head's projection is computed exactly once over the whole grid, so the total
        # MXU work equals one fused (L, d_model) x (d_model, H*E) projection, but operands
        # arrive as contiguous per-head tiles (no sub-128 lane slicing / relayout).
        q_h = jnp.dot(q_ref[...], wq_ref[...],
                      preferred_element_type=jnp.float32) + bq_ref[...]   # (L, E)
        k_h = jnp.dot(k_ref[...], wk_ref[...],
                      preferred_element_type=jnp.float32) + bk_ref[...]   # (S, E)
        v_h = jnp.dot(v_ref[...], wv_ref[...],
                      preferred_element_type=jnp.float32) + bv_ref[...]   # (S, Dv)

        # ---- scores = q_h @ k_h^T (no materialized transpose), bf16 MXU inputs on perf path
        if use_bf16_mxu:
            q_mm = q_h.astype(jnp.bfloat16)
            k_mm = k_h.astype(jnp.bfloat16)
        else:
            q_mm, k_mm = q_h, k_h
        s = lax.dot_general(q_mm, k_mm,
                            dimension_numbers=(((1,), (1,)), ((), ())),
                            preferred_element_type=jnp.float32)           # (L, S)

        # ---- softmax in f32; EUP approx reciprocal + one Newton step (denom >= 1) ----
        m = jnp.max(s, axis=-1, keepdims=True)
        e = jnp.exp(s - m)
        denom = jnp.sum(e, axis=-1, keepdims=True)
        r = pl.reciprocal(denom, approx=True)
        r = r * (2.0 - denom * r)
        p = e * r                                                          # (L, S)

        if a_ref is not None:
            a_ref[...] = p.astype(a_ref.dtype)        # per-head (L, S) block, f32

        # ---- context and output-projection accumulation ----
        if use_bf16_mxu:
            ctx = jnp.dot(p.astype(jnp.bfloat16), v_h.astype(jnp.bfloat16),
                          preferred_element_type=jnp.float32)              # (L, Dv)
        else:
            ctx = jnp.dot(p, v_h, preferred_element_type=jnp.float32)

        @pl.when(h == 0)
        def _():
            acc_ref[...] = jnp.zeros_like(acc_ref)

        acc_ref[...] += jnp.dot(ctx, wo_ref[...],
                                preferred_element_type=jnp.float32)        # (L, d_model_out)

        @pl.when(h == H - 1)
        def _():
            o_ref[...] = (acc_ref[...] + bo_ref[...]).astype(o_ref.dtype)

    return kernel


# ------------------------------------------------------------------
# One-time weight re-layout: per-head tiles, scale folded into Wq/bq
# ------------------------------------------------------------------
def prepare_params(params, n_heads, scale=None):
    H = n_heads
    wq = jnp.asarray(params["wq"], jnp.float32)   # (H*E,  d_model)
    wk = jnp.asarray(params["wk"], jnp.float32)   # (H*E,  d_model)
    wv = jnp.asarray(params["wv"], jnp.float32)   # (H*Dv, d_model)
    wo = jnp.asarray(params["wo"], jnp.float32)   # (d_model_out, H*Dv)
    bq = jnp.asarray(params["bq"], jnp.float32)
    bk = jnp.asarray(params["bk"], jnp.float32)
    bv = jnp.asarray(params["bv"], jnp.float32)
    bo = jnp.asarray(params["bo"], jnp.float32)

    d_model = wq.shape[1]
    E = wq.shape[0] // H
    Dv = wv.shape[0] // H
    d_model_out = wo.shape[0]
    if scale is None:
        scale = 1.0 / math.sqrt(E)

    def per_head(w_t, d_out):                      # (d_in, H*d_out) -> (H, d_in, d_out)
        d_in = w_t.shape[0]
        return w_t.reshape(d_in, H, d_out).transpose(1, 0, 2)

    return dict(
        wq_h=per_head(wq.T * scale, E), bq_h=(bq * scale).reshape(H, 1, E),
        wk_h=per_head(wk.T, E),         bk_h=bk.reshape(H, 1, E),
        wv_h=per_head(wv.T, Dv),        bv_h=bv.reshape(H, 1, Dv),
        wo_h=wo.T.reshape(H, Dv, d_model_out),
        bo=bo.reshape(1, d_model_out),
        n_heads=H, d_keys=E, d_values=Dv, d_model=d_model, d_model_out=d_model_out,
    )


# ------------------------------------------------------------------
# AttentionLayer forward — a single pallas_call, grid = (B, H)
# ------------------------------------------------------------------
def attention_layer_forward(prepared, queries, keys, values,
                            output_attention=True, use_bf16_mxu=True):
    B, L, d_model = queries.shape
    _, S, _ = keys.shape
    H = prepared["n_heads"]
    E = prepared["d_keys"]
    Dv = prepared["d_values"]
    dmo = prepared["d_model_out"]

    kernel = _make_fused_attention_kernel(H, use_bf16_mxu, output_attention)

    in_specs = [
        pl.BlockSpec((None, L, d_model), lambda b, h: (b, 0, 0)),     # queries  (per-batch)
        pl.BlockSpec((None, S, d_model), lambda b, h: (b, 0, 0)),     # keys
        pl.BlockSpec((None, S, d_model), lambda b, h: (b, 0, 0)),     # values
        pl.BlockSpec((None, d_model, E), lambda b, h: (h, 0, 0)),     # Wq^T  head tile
        pl.BlockSpec((None, 1, E),       lambda b, h: (h, 0, 0)),     # bq    head tile
        pl.BlockSpec((None, d_model, E), lambda b, h: (h, 0, 0)),     # Wk^T  head tile
        pl.BlockSpec((None, 1, E),       lambda b, h: (h, 0, 0)),     # bk    head tile
        pl.BlockSpec((None, d_model, Dv), lambda b, h: (h, 0, 0)),    # Wv^T  head tile
        pl.BlockSpec((None, 1, Dv),       lambda b, h: (h, 0, 0)),    # bv    head tile
        pl.BlockSpec((None, Dv, dmo),     lambda b, h: (h, 0, 0)),    # Wo^T  head tile
        pl.BlockSpec((1, dmo),            lambda b, h: (0, 0)),       # bo
    ]

    out_shape = [jax.ShapeDtypeStruct((B, L, dmo), jnp.float32)]
    out_specs = [pl.BlockSpec((None, L, dmo), lambda b, h: (b, 0, 0))]  # resident across h
    if output_attention:
        out_shape.append(jax.ShapeDtypeStruct((B, H, L, S), jnp.float32))
        out_specs.append(pl.BlockSpec((None, None, L, S), lambda b, h: (b, h, 0, 0)))

    # Explicit VMEM budget (review: v7x has 64 MiB physical / 32 MiB default scoped limit).
    f32 = 4
    blk_bytes = (L * d_model + 2 * S * d_model
                 + 2 * (d_model * E + E) + d_model * Dv + Dv + Dv * dmo + dmo
                 + L * dmo + (L * S if output_attention else 0)) * f32
    vmem_limit = int(min(max(4 * blk_bytes + L * dmo * f32, 8 << 20), 32 << 20))

    grid_spec = pltpu.PrefetchScalarGridSpec(
        num_scalar_prefetch=0,
        grid=(B, H),                                   # reduction axis (heads) last
        in_specs=in_specs,
        out_specs=tuple(out_specs),
        scratch_shapes=[pltpu.VMEM((L, dmo), jnp.float32)],   # output-projection accumulator
    )

    outs = pl.pallas_call(
        kernel,
        out_shape=tuple(out_shape),
        grid_spec=grid_spec,
        compiler_params=pltpu.CompilerParams(
            dimension_semantics=("parallel", "arbitrary"),
            vmem_limit_bytes=vmem_limit),
    )(queries, keys, values,
      prepared["wq_h"], prepared["bq_h"], prepared["wk_h"], prepared["bk_h"],
      prepared["wv_h"], prepared["bv_h"], prepared["wo_h"], prepared["bo"])

    if output_attention:
        return outs[0], outs[1]
    return outs[0], None


# ------------------------------------------------------------------
# Pure-JAX reference (for verification)
# ------------------------------------------------------------------
def reference_forward(params, queries, keys, values, n_heads):
    B, L, d_model = queries.shape
    _, S, _ = keys.shape
    H = n_heads
    q = (queries @ params["wq"].T + params["bq"]).reshape(B, L, H, -1)
    k = (keys @ params["wk"].T + params["bk"]).reshape(B, S, H, -1)
    v = (values @ params["wv"].T + params["bv"]).reshape(B, S, H, -1)
    E = q.shape[-1]
    scores = jnp.einsum("blhe,bshe->bhls", q, k) / math.sqrt(E)
    a = jax.nn.softmax(scores, axis=-1)
    o = jnp.einsum("bhls,bshd->blhd", a, v).reshape(B, L, -1)
    out = o @ params["wo"].T + params["bo"]
    return out, a


if __name__ == "__main__":
    # Small shapes consistent with the module
    B, L, S = 2, 8, 8
    d_model, n_heads = 32, 4
    d_keys = d_model // n_heads
    d_values = d_model // n_heads

    key = jax.random.PRNGKey(0)
    ks = jax.random.split(key, 11)

    def init_linear(kw, kb, out_f, in_f):
        bound = 1.0 / math.sqrt(in_f)
        w = jax.random.uniform(kw, (out_f, in_f), jnp.float32, -bound, bound)
        b = jax.random.uniform(kb, (out_f,), jnp.float32, -bound, bound)
        return w, b

    wq, bq = init_linear(ks[0], ks[1], d_keys * n_heads, d_model)
    wk, bk = init_linear(ks[2], ks[3], d_keys * n_heads, d_model)
    wv, bv = init_linear(ks[4], ks[5], d_values * n_heads, d_model)
    wo, bo = init_linear(ks[6], ks[7], d_model, d_values * n_heads)
    params = dict(wq=wq, bq=bq, wk=wk, bk=bk, wv=wv, bv=bv, wo=wo, bo=bo)

    queries = jax.random.normal(ks[8], (B, L, d_model), jnp.float32)
    keys_in = jax.random.normal(ks[9], (B, S, d_model), jnp.float32)
    values_in = jax.random.normal(ks[10], (B, S, d_model), jnp.float32)

    prepared = prepare_params(params, n_heads)   # one-time per-head weight re-layout

    ref_out, ref_attn = reference_forward(params, queries, keys_in, values_in, n_heads)

    # Exact path (f32 MXU inputs) — tight 1e-4 check.
    out_f32, attn_f32 = attention_layer_forward(prepared, queries, keys_in, values_in,
                                                output_attention=True, use_bf16_mxu=False)
    out_f32 = jax.block_until_ready(out_f32)
    attn_f32 = jax.block_until_ready(attn_f32)
    assert np.allclose(np.asarray(out_f32), np.asarray(ref_out), atol=1e-4, rtol=1e-4)
    assert np.allclose(np.asarray(attn_f32), np.asarray(ref_attn), atol=1e-4, rtol=1e-4)

    # Perf path (bf16 MXU inputs for QK^T and P@V, f32 accumulation / softmax / outputs).
    out_bf, attn_bf = attention_layer_forward(prepared, queries, keys_in, values_in,
                                              output_attention=True, use_bf16_mxu=True)
    out_bf = jax.block_until_ready(out_bf)
    attn_bf = jax.block_until_ready(attn_bf)
    assert np.allclose(np.asarray(out_bf), np.asarray(ref_out), atol=2e-2, rtol=2e-2)
    assert np.allclose(np.asarray(attn_bf), np.asarray(ref_attn), atol=2e-2, rtol=2e-2)

    print("KERNEL_OK")
</pallas_src>

<mosaic_0001>
module attributes {stable_mosaic.version = 11 : i64} {
  func.func @kernel(%arg0: i32, %arg1: i32, %arg2: memref<1x8x32xf32, #tpu.memory_space<vmem>>, %arg3: memref<1x8x32xf32, #tpu.memory_space<vmem>>, %arg4: memref<1x8x32xf32, #tpu.memory_space<vmem>>, %arg5: memref<1x32x8xf32, #tpu.memory_space<vmem>>, %arg6: memref<1x1x8xf32, #tpu.memory_space<vmem>>, %arg7: memref<1x32x8xf32, #tpu.memory_space<vmem>>, %arg8: memref<1x1x8xf32, #tpu.memory_space<vmem>>, %arg9: memref<1x32x8xf32, #tpu.memory_space<vmem>>, %arg10: memref<1x1x8xf32, #tpu.memory_space<vmem>>, %arg11: memref<1x8x32xf32, #tpu.memory_space<vmem>>, %arg12: memref<1x32xf32, #tpu.memory_space<vmem>>, %arg13: memref<1x8x32xf32, #tpu.memory_space<vmem>>, %arg14: memref<1x1x8x8xf32, #tpu.memory_space<vmem>>, %arg15: memref<8x32xf32, #tpu.memory_space<vmem>>) attributes {dimension_semantics = [#tpu.dimension_semantics<parallel>, #tpu.dimension_semantics<arbitrary>], iteration_bounds = array<i64: 2, 4>, scalar_prefetch = 0 : i64, scratch_operands = 1 : i64, tpu.core_type = #tpu.core_type<tc>, window_params = [{transform_indices = @transform_0, window_bounds = array<i64: 1, 8, 32>}, {transform_indices = @transform_1, window_bounds = array<i64: 1, 8, 32>}, {transform_indices = @transform_2, window_bounds = array<i64: 1, 8, 32>}, {transform_indices = @transform_3, window_bounds = array<i64: 1, 32, 8>}, {transform_indices = @transform_4, window_bounds = array<i64: 1, 1, 8>}, {transform_indices = @transform_5, window_bounds = array<i64: 1, 32, 8>}, {transform_indices = @transform_6, window_bounds = array<i64: 1, 1, 8>}, {transform_indices = @transform_7, window_bounds = array<i64: 1, 32, 8>}, {transform_indices = @transform_8, window_bounds = array<i64: 1, 1, 8>}, {transform_indices = @transform_9, window_bounds = array<i64: 1, 8, 32>}, {pipeline_mode = #tpu.pipeline_mode<synchronous>, transform_indices = @transform_10, window_bounds = array<i64: 1, 32>}, {transform_indices = @transform_11, window_bounds = array<i64: 1, 8, 32>}, {transform_indices = @transform_12, window_bounds = array<i64: 1, 1, 8, 8>}]} {
    %c0 = arith.constant 0 : index
    %c0_0 = arith.constant 0 : index
    %c0_1 = arith.constant 0 : index
    %0 = vector.load %arg2[%c0, %c0_0, %c0_1] : memref<1x8x32xf32, #tpu.memory_space<vmem>>, vector<1x8x32xf32>
    %1 = vector.shape_cast %0 : vector<1x8x32xf32> to vector<8x32xf32>
    %c0_2 = arith.constant 0 : index
    %c0_3 = arith.constant 0 : index
    %c0_4 = arith.constant 0 : index
    %2 = vector.load %arg5[%c0_2, %c0_3, %c0_4] : memref<1x32x8xf32, #tpu.memory_space<vmem>>, vector<1x32x8xf32>
    %3 = vector.shape_cast %2 : vector<1x32x8xf32> to vector<32x8xf32>
    %cst = arith.constant dense<0.000000e+00> : vector<8x8xf32>
    %4 = tpu.matmul %1, %3, %cst {dimension_numbers = #tpu.dot_dimension_numbers<[1], [0], [0], [1], [0, 0, 1, 1], [], []>} : vector<8x32xf32>, vector<32x8xf32>, vector<8x8xf32> -> vector<8x8xf32>
    %c0_5 = arith.constant 0 : index
    %c0_6 = arith.constant 0 : index
    %c0_7 = arith.constant 0 : index
    %5 = vector.load %arg6[%c0_5, %c0_6, %c0_7] : memref<1x1x8xf32, #tpu.memory_space<vmem>>, vector<1x1x8xf32>
    %6 = vector.shape_cast %5 : vector<1x1x8xf32> to vector<1x8xf32>
    %7 = vector.broadcast %6 : vector<1x8xf32> to vector<8x8xf32>
    %8 = arith.addf %4, %7 : vector<8x8xf32>
    %c0_8 = arith.constant 0 : index
    %c0_9 = arith.constant 0 : index
    %c0_10 = arith.constant 0 : index
    %9 = vector.load %arg3[%c0_8, %c0_9, %c0_10] : memref<1x8x32xf32, #tpu.memory_space<vmem>>, vector<1x8x32xf32>
    %10 = vector.shape_cast %9 : vector<1x8x32xf32> to vector<8x32xf32>
    %c0_11 = arith.constant 0 : index
    %c0_12 = arith.constant 0 : index
    %c0_13 = arith.constant 0 : index
    %11 = vector.load %arg7[%c0_11, %c0_12, %c0_13] : memref<1x32x8xf32, #tpu.memory_space<vmem>>, vector<1x32x8xf32>
    %12 = vector.shape_cast %11 : vector<1x32x8xf32> to vector<32x8xf32>
    %cst_14 = arith.constant dense<0.000000e+00> : vector<8x8xf32>
    %13 = tpu.matmul %10, %12, %cst_14 {dimension_numbers = #tpu.dot_dimension_numbers<[1], [0], [0], [1], [0, 0, 1, 1], [], []>} : vector<8x32xf32>, vector<32x8xf32>, vector<8x8xf32> -> vector<8x8xf32>
    %c0_15 = arith.constant 0 : index
    %c0_16 = arith.constant 0 : index
    %c0_17 = arith.constant 0 : index
    %14 = vector.load %arg8[%c0_15, %c0_16, %c0_17] : memref<1x1x8xf32, #tpu.memory_space<vmem>>, vector<1x1x8xf32>
    %15 = vector.shape_cast %14 : vector<1x1x8xf32> to vector<1x8xf32>
    %16 = vector.broadcast %15 : vector<1x8xf32> to vector<8x8xf32>
    %17 = arith.addf %13, %16 : vector<8x8xf32>
    %c0_18 = arith.constant 0 : index
    %c0_19 = arith.constant 0 : index
    %c0_20 = arith.constant 0 : index
    %18 = vector.load %arg4[%c0_18, %c0_19, %c0_20] : memref<1x8x32xf32, #tpu.memory_space<vmem>>, vector<1x8x32xf32>
    %19 = vector.shape_cast %18 : vector<1x8x32xf32> to vector<8x32xf32>
    %c0_21 = arith.constant 0 : index
    %c0_22 = arith.constant 0 : index
    %c0_23 = arith.constant 0 : index
    %20 = vector.load %arg9[%c0_21, %c0_22, %c0_23] : memref<1x32x8xf32, #tpu.memory_space<vmem>>, vector<1x32x8xf32>
    %21 = vector.shape_cast %20 : vector<1x32x8xf32> to vector<32x8xf32>
    %cst_24 = arith.constant dense<0.000000e+00> : vector<8x8xf32>
    %22 = tpu.matmul %19, %21, %cst_24 {dimension_numbers = #tpu.dot_dimension_numbers<[1], [0], [0], [1], [0, 0, 1, 1], [], []>} : vector<8x32xf32>, vector<32x8xf32>, vector<8x8xf32> -> vector<8x8xf32>
    %c0_25 = arith.constant 0 : index
    %c0_26 = arith.constant 0 : index
    %c0_27 = arith.constant 0 : index
    %23 = vector.load %arg10[%c0_25, %c0_26, %c0_27] : memref<1x1x8xf32, #tpu.memory_space<vmem>>, vector<1x1x8xf32>
    %24 = vector.shape_cast %23 : vector<1x1x8xf32> to vector<1x8xf32>
    %25 = vector.broadcast %24 : vector<1x8xf32> to vector<8x8xf32>
    %26 = arith.addf %22, %25 : vector<8x8xf32>
    %cst_28 = arith.constant dense<0.000000e+00> : vector<8x8xf32>
    %27 = tpu.matmul %8, %17, %cst_28 {dimension_numbers = #tpu.dot_dimension_numbers<[1], [1], [0], [0], [0, 0, 1, 0], [], []>} : vector<8x8xf32>, vector<8x8xf32>, vector<8x8xf32> -> vector<8x8xf32>
    %cst_29 = arith.constant dense<0xFF800000> : vector<8xf32>
    %28 = vector.multi_reduction <maximumf>, %27, %cst_29 [1] : vector<8x8xf32> to vector<8xf32>
    %29 = vector.shape_cast %28 : vector<8xf32> to vector<8x1xf32>
    %30 = vector.broadcast %29 : vector<8x1xf32> to vector<8x8xf32>
    %31 = arith.subf %27, %30 : vector<8x8xf32>
    %32 = math.exp %31 : vector<8x8xf32>
    %cst_30 = arith.constant dense<0.000000e+00> : vector<8xf32>
    %33 = vector.multi_reduction <add>, %32, %cst_30 [1] : vector<8x8xf32> to vector<8xf32>
    %34 = vector.shape_cast %33 : vector<8xf32> to vector<8x1xf32>
    %35 = tpu.reciprocal %34 {approx = true} : vector<8x1xf32> -> vector<8x1xf32>
    %36 = arith.mulf %34, %35 : vector<8x1xf32>
    %cst_31 = arith.constant 2.000000e+00 : f32
    %37 = vector.broadcast %cst_31 : f32 to vector<8x1xf32>
    %38 = arith.subf %37, %36 : vector<8x1xf32>
    %39 = arith.mulf %35, %38 : vector<8x1xf32>
    %40 = vector.broadcast %39 : vector<8x1xf32> to vector<8x8xf32>
    %41 = arith.mulf %32, %40 : vector<8x8xf32>
    %c0_32 = arith.constant 0 : index
    %c0_33 = arith.constant 0 : index
    %c0_34 = arith.constant 0 : index
    %c0_35 = arith.constant 0 : index
    %42 = vector.load %arg14[%c0_32, %c0_33, %c0_34, %c0_35] : memref<1x1x8x8xf32, #tpu.memory_space<vmem>>, vector<1x1x8x8xf32>
    %43 = vector.shape_cast %42 : vector<1x1x8x8xf32> to vector<8x8xf32>
    %44 = vector.shape_cast %41 : vector<8x8xf32> to vector<1x1x8x8xf32>
    tpu.vector_store %arg14[%c0_32, %c0_33, %c0_34, %c0_35], %44 {strides = array<i32>} : memref<1x1x8x8xf32, #tpu.memory_space<vmem>>, vector<1x1x8x8xf32>,
    %cst_36 = arith.constant dense<0.000000e+00> : vector<8x8xf32>
    %45 = tpu.matmul %41, %26, %cst_36 {dimension_numbers = #tpu.dot_dimension_numbers<[1], [0], [0], [1], [0, 0, 1, 1], [], []>} : vector<8x8xf32>, vector<8x8xf32>, vector<8x8xf32> -> vector<8x8xf32>
    %c0_i32 = arith.constant 0 : i32
    %46 = arith.cmpi eq, %arg1, %c0_i32 : i32
    %47 = arith.extui %46 : i1 to i32
    %c0_i32_37 = arith.constant 0 : i32
    %48 = arith.cmpi ne, %47, %c0_i32_37 : i32
    scf.if %48 {
      %cst_47 = arith.constant 0.000000e+00 : f32
      %58 = vector.broadcast %cst_47 : f32 to vector<8x32xf32>
      %c0_48 = arith.constant 0 : index
      %c0_49 = arith.constant 0 : index
      %59 = vector.load %arg15[%c0_48, %c0_49] : memref<8x32xf32, #tpu.memory_space<vmem>>, vector<8x32xf32>
      tpu.vector_store %arg15[%c0_48, %c0_49], %58 {strides = array<i32>} : memref<8x32xf32, #tpu.memory_space<vmem>>, vector<8x32xf32>,
    } else {
    }
    %c0_38 = arith.constant 0 : index
    %c0_39 = arith.constant 0 : index
    %49 = vector.load %arg15[%c0_38, %c0_39] : memref<8x32xf32, #tpu.memory_space<vmem>>, vector<8x32xf32>
    %c0_40 = arith.constant 0 : index
    %c0_41 = arith.constant 0 : index
    %c0_42 = arith.constant 0 : index
    %50 = vector.load %arg11[%c0_40, %c0_41, %c0_42] : memref<1x8x32xf32, #tpu.memory_space<vmem>>, vector<1x8x32xf32>
    %51 = vector.shape_cast %50 : vector<1x8x32xf32> to vector<8x32xf32>
    %cst_43 = arith.constant dense<0.000000e+00> : vector<8x32xf32>
    %52 = tpu.matmul %45, %51, %cst_43 {dimension_numbers = #tpu.dot_dimension_numbers<[1], [0], [0], [1], [0, 0, 1, 1], [], []>} : vector<8x8xf32>, vector<8x32xf32>, vector<8x32xf32> -> vector<8x32xf32>
    %53 = arith.addf %49, %52 : vector<8x32xf32>
    %c0_44 = arith.constant 0 : index
    %c0_45 = arith.constant 0 : index
    %54 = vector.load %arg15[%c0_44, %c0_45] : memref<8x32xf32, #tpu.memory_space<vmem>>, vector<8x32xf32>
    tpu.vector_store %arg15[%c0_44, %c0_45], %53 {strides = array<i32>} : memref<8x32xf32, #tpu.memory_space<vmem>>, vector<8x32xf32>,
    %c3_i32 = arith.constant 3 : i32
    %55 = arith.cmpi eq, %arg1, %c3_i32 : i32
    %56 = arith.extui %55 : i1 to i32
    %c0_i32_46 = arith.constant 0 : i32
    %57 = arith.cmpi ne, %56, %c0_i32_46 : i32
    scf.if %57 {
      %c0_47 = arith.constant 0 : index
      %c0_48 = arith.constant 0 : index
      %58 = vector.load %arg15[%c0_47, %c0_48] : memref<8x32xf32, #tpu.memory_space<vmem>>, vector<8x32xf32>
      %c0_49 = arith.constant 0 : index
      %c0_50 = arith.constant 0 : index
      %59 = vector.load %arg12[%c0_49, %c0_50] : memref<1x32xf32, #tpu.memory_space<vmem>>, vector<1x32xf32>
      %60 = vector.broadcast %59 : vector<1x32xf32> to vector<8x32xf32>
      %61 = arith.addf %58, %60 : vector<8x32xf32>
      %c0_51 = arith.constant 0 : index
      %c0_52 = arith.constant 0 : index
      %c0_53 = arith.constant 0 : index
      %62 = vector.load %arg13[%c0_51, %c0_52, %c0_53] : memref<1x8x32xf32, #tpu.memory_space<vmem>>, vector<1x8x32xf32>
      %63 = vector.shape_cast %62 : vector<1x8x32xf32> to vector<8x32xf32>
      %64 = vector.shape_cast %61 : vector<8x32xf32> to vector<1x8x32xf32>
      tpu.vector_store %arg13[%c0_51, %c0_52, %c0_53], %64 {strides = array<i32>} : memref<1x8x32xf32, #tpu.memory_space<vmem>>, vector<1x8x32xf32>,
    } else {
    }
    return
  }
  func.func @transform_0(%arg0: i32, %arg1: i32) -> (i32, i32, i32) {
    %c0_i32 = arith.constant 0 : i32
    %c0_i32_0 = arith.constant 0 : i32
    %c0_i32_1 = arith.constant 0 : i32
    return %arg0, %c0_i32, %c0_i32_0 : i32, i32, i32
  }
  func.func @transform_1(%arg0: i32, %arg1: i32) -> (i32, i32, i32) {
    %c0_i32 = arith.constant 0 : i32
    %c0_i32_0 = arith.constant 0 : i32
    %c0_i32_1 = arith.constant 0 : i32
    return %arg0, %c0_i32, %c0_i32_0 : i32, i32, i32
  }
  func.func @transform_2(%arg0: i32, %arg1: i32) -> (i32, i32, i32) {
    %c0_i32 = arith.constant 0 : i32
    %c0_i32_0 = arith.constant 0 : i32
    %c0_i32_1 = arith.constant 0 : i32
    return %arg0, %c0_i32, %c0_i32_0 : i32, i32, i32
  }
  func.func @transform_3(%arg0: i32, %arg1: i32) -> (i32, i32, i32) {
    %c0_i32 = arith.constant 0 : i32
    %c0_i32_0 = arith.constant 0 : i32
    %c0_i32_1 = arith.constant 0 : i32
    return %arg1, %c0_i32, %c0_i32_0 : i32, i32, i32
  }
  func.func @transform_4(%arg0: i32, %arg1: i32) -> (i32, i32, i32) {
    %c0_i32 = arith.constant 0 : i32
    %c0_i32_0 = arith.constant 0 : i32
    %c0_i32_1 = arith.constant 0 : i32
    return %arg1, %c0_i32, %c0_i32_0 : i32, i32, i32
  }
  func.func @transform_5(%arg0: i32, %arg1: i32) -> (i32, i32, i32) {
    %c0_i32 = arith.constant 0 : i32
    %c0_i32_0 = arith.constant 0 : i32
    %c0_i32_1 = arith.constant 0 : i32
    return %arg1, %c0_i32, %c0_i32_0 : i32, i32, i32
  }
  func.func @transform_6(%arg0: i32, %arg1: i32) -> (i32, i32, i32) {
    %c0_i32 = arith.constant 0 : i32
    %c0_i32_0 = arith.constant 0 : i32
    %c0_i32_1 = arith.constant 0 : i32
    return %arg1, %c0_i32, %c0_i32_0 : i32, i32, i32
  }
  func.func @transform_7(%arg0: i32, %arg1: i32) -> (i32, i32, i32) {
    %c0_i32 = arith.constant 0 : i32
    %c0_i32_0 = arith.constant 0 : i32
    %c0_i32_1 = arith.constant 0 : i32
    return %arg1, %c0_i32, %c0_i32_0 : i32, i32, i32
  }
  func.func @transform_8(%arg0: i32, %arg1: i32) -> (i32, i32, i32) {
    %c0_i32 = arith.constant 0 : i32
    %c0_i32_0 = arith.constant 0 : i32
    %c0_i32_1 = arith.constant 0 : i32
    return %arg1, %c0_i32, %c0_i32_0 : i32, i32, i32
  }
  func.func @transform_9(%arg0: i32, %arg1: i32) -> (i32, i32, i32) {
    %c0_i32 = arith.constant 0 : i32
    %c0_i32_0 = arith.constant 0 : i32
    %c0_i32_1 = arith.constant 0 : i32
    return %arg1, %c0_i32, %c0_i32_0 : i32, i32, i32
  }
  func.func @transform_10(%arg0: i32, %arg1: i32) -> (i32, i32) {
    %c0_i32 = arith.constant 0 : i32
    %c0_i32_0 = arith.constant 0 : i32
    %c0_i32_1 = arith.constant 0 : i32
    return %c0_i32, %c0_i32_0 : i32, i32
  }
  func.func @transform_11(%arg0: i32, %arg1: i32) -> (i32, i32, i32) {
    %c0_i32 = arith.constant 0 : i32
    %c0_i32_0 = arith.constant 0 : i32
    %c0_i32_1 = arith.constant 0 : i32
    return %arg0, %c0_i32, %c0_i32_0 : i32, i32, i32
  }
  func.func @transform_12(%arg0: i32, %arg1: i32) -> (i32, i32, i32, i32) {
    %c0_i32 = arith.constant 0 : i32
    %c0_i32_0 = arith.constant 0 : i32
    %c0_i32_1 = arith.constant 0 : i32
    return %arg0, %arg1, %c0_i32, %c0_i32_0 : i32, i32, i32, i32
  }
}

</mosaic_0001>

<llo_original>
// kernel: tpu_custom_call.1
$region0: #{tpu_custom_call.1}
  #allocation0 [shape = 'u32[]', space=smem, size = 0x4, offset = 0x4, fixed_abs, tag = 'smem constant byte address 0x4 - core index']
  #allocation1 [shape = 'u32[72,128]{1,0:T(1,128)}', space=vmem, size = 0x9000, scoped, tag = 'internal scratch']
  #allocation2 [shape = 'f32[8,32]{1,0:T(8,128)}', space=vmem, size = 0x1000, scoped, tag = 'scratch operand']
  %s0 = inlined_call_operand.vmem [shape: f32[2,8,32], index: 0, kind: input, shape index: {}]
  %s1 = inlined_call_operand.vmem [shape: f32[2,8,32], index: 1, kind: input, shape index: {}]
  %s2 = inlined_call_operand.vmem [shape: f32[2,8,32], index: 2, kind: input, shape index: {}]
  %s3 = inlined_call_operand.vmem [shape: f32[4,32,8], index: 3, kind: input, shape index: {}]
  %s4 = inlined_call_operand.vmem [shape: f32[4,1,8], index: 4, kind: input, shape index: {}]
  %s5 = inlined_call_operand.vmem [shape: f32[4,32,8], index: 5, kind: input, shape index: {}]
  %s6 = inlined_call_operand.vmem [shape: f32[4,1,8], index: 6, kind: input, shape index: {}]
  %s7 = inlined_call_operand.vmem [shape: f32[4,32,8], index: 7, kind: input, shape index: {}]
  %s8 = inlined_call_operand.vmem [shape: f32[4,1,8], index: 8, kind: input, shape index: {}]
  %s9 = inlined_call_operand.vmem [shape: f32[4,8,32], index: 9, kind: input, shape index: {}]
  %s10 = inlined_call_operand.vmem [shape: f32[1,32], index: 10, kind: input, shape index: {}]
  %s11 = inlined_call_operand.hbm [shape: f32[2,8,32], index: 11, kind: output, shape index: {0}]
  %s12 = inlined_call_operand.hbm [shape: f32[2,4,8,8], index: 12, kind: output, shape index: {1}]
  %13 = xla_tuple %s11, %s12
  %s14 = sld [smem:[#allocation0]]
  $region93: #{tpu_custom_call.1} parent=0
    _
  %s16 = ssub.s32 1, %s14
  %s17 = scalar_select 0, %s16, %s14
  $region1: #{tpu_custom_call.1} parent=0
    #allocation3 [shape = 'u8[8192]{0}', space=vmem, size = 0x2000, scoped, tag = 'output window, operand 0']
    #allocation4 [shape = 's32[2]{0}', space=sflag, size = 0x8, scoped, tag = 'scoped memory for tpu_custom_call.1']
    #allocation5 [shape = 'u8[8192]{0}', space=vmem, size = 0x2000, scoped, tag = 'output window, operand 1']
    #allocation6 [shape = 's32[2]{0}', space=sflag, size = 0x8, scoped, tag = 'scoped memory for tpu_custom_call.1']
    %18 = vsyncpa [#allocation4], 0
    %s19 = scalar_lea.sflag [#allocation4], 1
    %20 = vsyncpa %s19, 0
    %21 = vsyncpa [#allocation6], 0
    %s22 = scalar_lea.sflag [#allocation6], 1
    %23 = vsyncpa %s22, 0
    loop: start=0, step=1, limit=10
    $region2: #{tpu_custom_call.1} parent=1 // loop_pre_header
      _
    $region3: #{tpu_custom_call.1} parent=1 // loop_header
      %s25 = sphi 0, %s29
      %p26 = scmp.ge.s32.totalorder %s25, 10
      %s32 = sphi 0, %s44
      %s33 = sphi 0, %s40
      %s34 = sphi 0, %s32
      %s35 = sphi 0, %s33
      %s36 = sphi 0, %s34
      %s37 = sphi 0, %s35
      %s47 = sphi 0, %s49
      %s50 = sphi 0, %s47
      %s51 = sphi 0, %s50
      %s67 = sphi 0, %s51
      %s73 = sphi 0, %s75
      %s76 = sphi 0, %s73
      %s77 = sphi 0, %s76
      %s93 = sphi 0, %s77
      %s99 = sphi 0, %s101
      %s102 = sphi 0, %s99
      %s103 = sphi 0, %s102
      %s119 = sphi 0, %s103
      %s125 = sphi 0, %s127
      %s128 = sphi 0, %s125
      %s129 = sphi 0, %s128
      %s145 = sphi 0, %s129
      %s151 = sphi 0, %s153
      %s154 = sphi 0, %s151
      %s155 = sphi 0, %s154
      %s171 = sphi 0, %s155
      %s177 = sphi 0, %s179
      %s180 = sphi 0, %s177
      %s181 = sphi 0, %s180
      %s197 = sphi 0, %s181
      %s203 = sphi 0, %s205
      %s206 = sphi 0, %s203
      %s207 = sphi 0, %s206
      %s223 = sphi 0, %s207
      %s229 = sphi 0, %s231
      %s232 = sphi 0, %s229
      %s233 = sphi 0, %s232
      %s249 = sphi 0, %s233
      %s255 = sphi 0, %s257
      %s258 = sphi 0, %s255
      %s259 = sphi 0, %s258
      %s275 = sphi 0, %s259
      %s281 = sphi 0, %s283
      %s284 = sphi 0, %s281
      %s285 = sphi 0, %s284
      %s301 = sphi 0, %s285
      %s305 = sphi 0, %s305
      %s307 = sphi 0, %s305
      %s308 = sphi 0, %s307
      %s322 = sphi 0, %s308
      %s328 = sphi 0, %s330
      %s331 = sphi 0, %s328
      %s332 = sphi 0, %s331
      %s348 = sphi 0, %s332
      %s356 = sphi 0, %s358
      %s359 = sphi 0, %s356
      %s360 = sphi 0, %s359
      %s376 = sphi 0, %s360
    $region4: #{tpu_custom_call.1} parent=1 // loop_header_branch
      %28 = sbr.rel (%p26) target = $region8
    $region5: #{tpu_custom_call.1} parent=1 // loop_body
      %s30 = ssub.s32 %s25, 1
      %s31 = ssub.s32 %s25, 2
      %s38 = sadd.s32 1, %s33
      %p39 = scmp.ge.s32.totalorder %s38, 4
      %s40 = scalar_select %p39, 0, %s38
      %s41 = sadd.s32 1, %s32
      %s42 = scalar_select %p39, %s41, %s32
      %p43 = scmp.ge.s32.totalorder %s42, 2
      %s44 = scalar_select %p43, 0, %s42
      %s45 = ssub.s32 %s32, %s44
      %p46 = scmp.eq.s32.totalorder %s45, 0
      %s48 = sadd.s32 %s47, 1
      %s49 = scalar_select %p46, %s47, %s48
      %p52 = pneg %p46
      %p53 = scmp.eq.s32.totalorder %s25, 7
      %p54 = por %p52, %p53
      %p55 = scmp.ne.s32.totalorder %s47, %s50
      %p56 = scmp.eq.s32.totalorder %s25, 0
      %p57 = por %p55, %p56
      %p58 = scmp.ne.s32.totalorder %s47, %s50
      %p59 = scmp.eq.s32.totalorder %s30, 7
      %p60 = por %p58, %p59
      %p61 = scmp.ne.s32.totalorder %s50, %s51
      %p62 = scmp.eq.s32.totalorder %s30, 0
      %p63 = por %p61, %p62
      %p64 = scmp.ne.s32.totalorder %s50, %s51
      %p65 = scmp.eq.s32.totalorder %s31, 7
      %p66 = por %p64, %p65
      %p68 = scmp.ne.s32.totalorder %s51, %s67
      %p69 = scmp.eq.s32.totalorder %s31, 0
      %p70 = por %p68, %p69
      %s71 = ssub.s32 %s32, %s44
      %p72 = scmp.eq.s32.totalorder %s71, 0
      %s74 = sadd.s32 %s73, 1
      %s75 = scalar_select %p72, %s73, %s74
      %p78 = pneg %p72
      %p79 = scmp.eq.s32.totalorder %s25, 7
      %p80 = por %p78, %p79
      %p81 = scmp.ne.s32.totalorder %s73, %s76
      %p82 = scmp.eq.s32.totalorder %s25, 0
      %p83 = por %p81, %p82
      %p84 = scmp.ne.s32.totalorder %s73, %s76
      %p85 = scmp.eq.s32.totalorder %s30, 7
      %p86 = por %p84, %p85
      %p87 = scmp.ne.s32.totalorder %s76, %s77
      %p88 = scmp.eq.s32.totalorder %s30, 0
      %p89 = por %p87, %p88
      %p90 = scmp.ne.s32.totalorder %s76, %s77
      %p91 = scmp.eq.s32.totalorder %s31, 7
      %p92 = por %p90, %p91
      %p94 = scmp.ne.s32.totalorder %s77, %s93
      %p95 = scmp.eq.s32.totalorder %s31, 0
      %p96 = por %p94, %p95
      %s97 = ssub.s32 %s32, %s44
      %p98 = scmp.eq.s32.totalorder %s97, 0
      %s100 = sadd.s32 %s99, 1
      %s101 = scalar_select %p98, %s99, %s100
      %p104 = pneg %p98
      %p105 = scmp.eq.s32.totalorder %s25, 7
      %p106 = por %p104, %p105
      %p107 = scmp.ne.s32.totalorder %s99, %s102
      %p108 = scmp.eq.s32.totalorder %s25, 0
      %p109 = por %p107, %p108
      %p110 = scmp.ne.s32.totalorder %s99, %s102
      %p111 = scmp.eq.s32.totalorder %s30, 7
      %p112 = por %p110, %p111
      %p113 = scmp.ne.s32.totalorder %s102, %s103
      %p114 = scmp.eq.s32.totalorder %s30, 0
      %p115 = por %p113, %p114
      %p116 = scmp.ne.s32.totalorder %s102, %s103
      %p117 = scmp.eq.s32.totalorder %s31, 7
      %p118 = por %p116, %p117
      %p120 = scmp.ne.s32.totalorder %s103, %s119
      %p121 = scmp.eq.s32.totalorder %s31, 0
      %p122 = por %p120, %p121
      %s123 = ssub.s32 %s33, %s40
      %p124 = scmp.eq.s32.totalorder %s123, 0
      %s126 = sadd.s32 %s125, 1
      %s127 = scalar_select %p124, %s125, %s126
      %p130 = pneg %p124
      %p131 = scmp.eq.s32.totalorder %s25, 7
      %p132 = por %p130, %p131
      %p133 = scmp.ne.s32.totalorder %s125, %s128
      %p134 = scmp.eq.s32.totalorder %s25, 0
      %p135 = por %p133, %p134
      %p136 = scmp.ne.s32.totalorder %s125, %s128
      %p137 = scmp.eq.s32.totalorder %s30, 7
      %p138 = por %p136, %p137
      %p139 = scmp.ne.s32.totalorder %s128, %s129
      %p140 = scmp.eq.s32.totalorder %s30, 0
      %p141 = por %p139, %p140
      %p142 = scmp.ne.s32.totalorder %s128, %s129
      %p143 = scmp.eq.s32.totalorder %s31, 7
      %p144 = por %p142, %p143
      %p146 = scmp.ne.s32.totalorder %s129, %s145
      %p147 = scmp.eq.s32.totalorder %s31, 0
      %p148 = por %p146, %p147
      %s149 = ssub.s32 %s33, %s40
      %p150 = scmp.eq.s32.totalorder %s149, 0
      %s152 = sadd.s32 %s151, 1
      %s153 = scalar_select %p150, %s151, %s152
      %p156 = pneg %p150
      %p157 = scmp.eq.s32.totalorder %s25, 7
      %p158 = por %p156, %p157
      %p159 = scmp.ne.s32.totalorder %s151, %s154
      %p160 = scmp.eq.s32.totalorder %s25, 0
      %p161 = por %p159, %p160
      %p162 = scmp.ne.s32.totalorder %s151, %s154
      %p163 = scmp.eq.s32.totalorder %s30, 7
      %p164 = por %p162, %p163
      %p165 = scmp.ne.s32.totalorder %s154, %s155
      %p166 = scmp.eq.s32.totalorder %s30, 0
      %p167 = por %p165, %p166
      %p168 = scmp.ne.s32.totalorder %s154, %s155
      %p169 = scmp.eq.s32.totalorder %s31, 7
      %p170 = por %p168, %p169
      %p172 = scmp.ne.s32.totalorder %s155, %s171
      %p173 = scmp.eq.s32.totalorder %s31, 0
      %p174 = por %p172, %p173
      %s175 = ssub.s32 %s33, %s40
      %p176 = scmp.eq.s32.totalorder %s175, 0
      %s178 = sadd.s32 %s177, 1
      %s179 = scalar_select %p176, %s177, %s178
      %p182 = pneg %p176
      %p183 = scmp.eq.s32.totalorder %s25, 7
      %p184 = por %p182, %p183
      %p185 = scmp.ne.s32.totalorder %s177, %s180
      %p186 = scmp.eq.s32.totalorder %s25, 0
      %p187 = por %p185, %p186
      %p188 = scmp.ne.s32.totalorder %s177, %s180
      %p189 = scmp.eq.s32.totalorder %s30, 7
      %p190 = por %p188, %p189
      %p191 = scmp.ne.s32.totalorder %s180, %s181
      %p192 = scmp.eq.s32.totalorder %s30, 0
      %p193 = por %p191, %p192
      %p194 = scmp.ne.s32.totalorder %s180, %s181
      %p195 = scmp.eq.s32.totalorder %s31, 7
      %p196 = por %p194, %p195
      %p198 = scmp.ne.s32.totalorder %s181, %s197
      %p199 = scmp.eq.s32.totalorder %s31, 0
      %p200 = por %p198, %p199
      %s201 = ssub.s32 %s33, %s40
      %p202 = scmp.eq.s32.totalorder %s201, 0
      %s204 = sadd.s32 %s203, 1
      %s205 = scalar_select %p202, %s203, %s204
      %p208 = pneg %p202
      %p209 = scmp.eq.s32.totalorder %s25, 7
      %p210 = por %p208, %p209
      %p211 = scmp.ne.s32.totalorder %s203, %s206
      %p212 = scmp.eq.s32.totalorder %s25, 0
      %p213 = por %p211, %p212
      %p214 = scmp.ne.s32.totalorder %s203, %s206
      %p215 = scmp.eq.s32.totalorder %s30, 7
      %p216 = por %p214, %p215
      %p217 = scmp.ne.s32.totalorder %s206, %s207
      %p218 = scmp.eq.s32.totalorder %s30, 0
      %p219 = por %p217, %p218
      %p220 = scmp.ne.s32.totalorder %s206, %s207
      %p221 = scmp.eq.s32.totalorder %s31, 7
      %p222 = por %p220, %p221
      %p224 = scmp.ne.s32.totalorder %s207, %s223
      %p225 = scmp.eq.s32.totalorder %s31, 0
      %p226 = por %p224, %p225
      %s227 = ssub.s32 %s33, %s40
      %p228 = scmp.eq.s32.totalorder %s227, 0
      %s230 = sadd.s32 %s229, 1
      %s231 = scalar_select %p228, %s229, %s230
      %p234 = pneg %p228
      %p235 = scmp.eq.s32.totalorder %s25, 7
      %p236 = por %p234, %p235
      %p237 = scmp.ne.s32.totalorder %s229, %s232
      %p238 = scmp.eq.s32.totalorder %s25, 0
      %p239 = por %p237, %p238
      %p240 = scmp.ne.s32.totalorder %s229, %s232
      %p241 = scmp.eq.s32.totalorder %s30, 7
      %p242 = por %p240, %p241
      %p243 = scmp.ne.s32.totalorder %s232, %s233
      %p244 = scmp.eq.s32.totalorder %s30, 0
      %p245 = por %p243, %p244
      %p246 = scmp.ne.s32.totalorder %s232, %s233
      %p247 = scmp.eq.s32.totalorder %s31, 7
      %p248 = por %p246, %p247
      %p250 = scmp.ne.s32.totalorder %s233, %s249
      %p251 = scmp.eq.s32.totalorder %s31, 0
      %p252 = por %p250, %p251
      %s253 = ssub.s32 %s33, %s40
      %p254 = scmp.eq.s32.totalorder %s253, 0
      %s256 = sadd.s32 %s255, 1
      %s257 = scalar_select %p254, %s255, %s256
      %p260 = pneg %p254
      %p261 = scmp.eq.s32.totalorder %s25, 7
      %p262 = por %p260, %p261
      %p263 = scmp.ne.s32.totalorder %s255, %s258
      %p264 = scmp.eq.s32.totalorder %s25, 0
      %p265 = por %p263, %p264
      %p266 = scmp.ne.s32.totalorder %s255, %s258
      %p267 = scmp.eq.s32.totalorder %s30, 7
      %p268 = por %p266, %p267
      %p269 = scmp.ne.s32.totalorder %s258, %s259
      %p270 = scmp.eq.s32.totalorder %s30, 0
      %p271 = por %p269, %p270
      %p272 = scmp.ne.s32.totalorder %s258, %s259
      %p273 = scmp.eq.s32.totalorder %s31, 7
      %p274 = por %p272, %p273
      %p276 = scmp.ne.s32.totalorder %s259, %s275
      %p277 = scmp.eq.s32.totalorder %s31, 0
      %p278 = por %p276, %p277
      %s279 = ssub.s32 %s33, %s40
      %p280 = scmp.eq.s32.totalorder %s279, 0
      %s282 = sadd.s32 %s281, 1
      %s283 = scalar_select %p280, %s281, %s282
      %p286 = pneg %p280
      %p287 = scmp.eq.s32.totalorder %s25, 7
      %p288 = por %p286, %p287
      %p289 = scmp.ne.s32.totalorder %s281, %s284
      %p290 = scmp.eq.s32.totalorder %s25, 0
      %p291 = por %p289, %p290
      %p292 = scmp.ne.s32.totalorder %s281, %s284
      %p293 = scmp.eq.s32.totalorder %s30, 7
      %p294 = por %p292, %p293
      %p295 = scmp.ne.s32.totalorder %s284, %s285
      %p296 = scmp.eq.s32.totalorder %s30, 0
      %p297 = por %p295, %p296
      %p298 = scmp.ne.s32.totalorder %s284, %s285
      %p299 = scmp.eq.s32.totalorder %s31, 7
      %p300 = por %p298, %p299
      %p302 = scmp.ne.s32.totalorder %s285, %s301
      %p303 = scmp.eq.s32.totalorder %s31, 0
      %p304 = por %p302, %p303
      %s306 = sadd.s32 %s305, 1
      %p309 = scmp.eq.s32.totalorder %s25, 7
      %p310 = scmp.ne.s32.totalorder %s305, %s307
      %p311 = scmp.eq.s32.totalorder %s25, 0
      %p312 = por %p310, %p311
      %p313 = scmp.ne.s32.totalorder %s305, %s307
      %p314 = scmp.eq.s32.totalorder %s30, 7
      %p315 = por %p313, %p314
      %p316 = scmp.ne.s32.totalorder %s307, %s308
      %p317 = scmp.eq.s32.totalorder %s30, 0
      %p318 = por %p316, %p317
      %p319 = scmp.ne.s32.totalorder %s307, %s308
      %p320 = scmp.eq.s32.totalorder %s31, 7
      %p321 = por %p319, %p320
      %p323 = scmp.ne.s32.totalorder %s308, %s322
      %p324 = scmp.eq.s32.totalorder %s31, 0
      %p325 = por %p323, %p324
      %s326 = ssub.s32 %s32, %s44
      %p327 = scmp.eq.s32.totalorder %s326, 0
      %s329 = sadd.s32 %s328, 1
      %s330 = scalar_select %p327, %s328, %s329
      %p333 = pneg %p327
      %p334 = scmp.eq.s32.totalorder %s25, 7
      %p335 = por %p333, %p334
      %p336 = scmp.ne.s32.totalorder %s328, %s331
      %p337 = scmp.eq.s32.totalorder %s25, 0
      %p338 = por %p336, %p337
      %p339 = scmp.ne.s32.totalorder %s328, %s331
      %p340 = scmp.eq.s32.totalorder %s30, 7
      %p341 = por %p339, %p340
      %p342 = scmp.ne.s32.totalorder %s331, %s332
      %p343 = scmp.eq.s32.totalorder %s30, 0
      %p344 = por %p342, %p343
      %p345 = scmp.ne.s32.totalorder %s331, %s332
      %p346 = scmp.eq.s32.totalorder %s31, 7
      %p347 = por %p345, %p346
      %p349 = scmp.ne.s32.totalorder %s332, %s348
      %p350 = scmp.eq.s32.totalorder %s31, 0
      %p351 = por %p349, %p350
      %s352 = ssub.s32 %s32, %s44
      %s353 = ssub.s32 %s33, %s40
      %s354 = sor.u32 %s352, %s353
      %p355 = scmp.eq.s32.totalorder %s354, 0
      %s357 = sadd.s32 %s356, 1
      %s358 = scalar_select %p355, %s356, %s357
      %p361 = pneg %p355
      %p362 = scmp.eq.s32.totalorder %s25, 7
      %p363 = por %p361, %p362
      %p364 = scmp.ne.s32.totalorder %s356, %s359
      %p365 = scmp.eq.s32.totalorder %s25, 0
      %p366 = por %p364, %p365
      %p367 = scmp.ne.s32.totalorder %s356, %s359
      %p368 = scmp.eq.s32.totalorder %s30, 7
      %p369 = por %p367, %p368
      %p370 = scmp.ne.s32.totalorder %s359, %s360
      %p371 = scmp.eq.s32.totalorder %s30, 0
      %p372 = por %p370, %p371
      %p373 = scmp.ne.s32.totalorder %s359, %s360
      %p374 = scmp.eq.s32.totalorder %s31, 7
      %p375 = por %p373, %p374
      %p377 = scmp.ne.s32.totalorder %s360, %s376
      %p378 = scmp.eq.s32.totalorder %s31, 0
      %p379 = por %p377, %p378
      %p380 = scmp.le.s32.totalorder 1, %s25
      %p381 = scmp.lt.s32.totalorder %s25, 9
      %p382 = pnand %p380, %p381
      %p383 = pneg %p382
      // Predicated region
      $region9: #{tpu_custom_call.1} parent=5 // pred_check
        _
      $region10: #{tpu_custom_call.1} parent=5 // pred_check_branch
        %385 = sbr.rel (%p382) target = $region12
      $region11: #{tpu_custom_call.1} parent=5 // pred_region
        %s386 = ssub.s32 %s25, 1
        // Predicated region
        $region13: #{tpu_custom_call.1} parent=11 // pred_check
          %p387 = pneg %p318
        $region14: #{tpu_custom_call.1} parent=11 // pred_check_branch
          %389 = sbr.rel (%p387) target = $region16
        $region15: #{tpu_custom_call.1} parent=11 // pred_region
          _
        $region16: #{tpu_custom_call.1} parent=11 // pred_fallthru
          _
      $region12: #{tpu_custom_call.1} parent=5 // pred_fallthru
        _
      %p390 = scmp.lt.s32.totalorder %s25, 8
      // Predicated region
      $region17: #{tpu_custom_call.1} parent=5 // pred_check
        %p391 = pneg %p390
      $region18: #{tpu_custom_call.1} parent=5 // pred_check_branch
        %393 = sbr.rel (%p391) target = $region20
      $region19: #{tpu_custom_call.1} parent=5 // pred_region
        // Predicated region
        $region21: #{tpu_custom_call.1} parent=19 // pred_check
          %p394 = pneg %p57
        $region22: #{tpu_custom_call.1} parent=19 // pred_check_branch
          %396 = sbr.rel (%p394) target = $region24
        $region23: #{tpu_custom_call.1} parent=19 // pred_region
          %p397 = scmp.lt.s32.totalorder %s32, 1
          %s398 = scalar_select %p397, %s32, 1
          %s399 = smul.addr %s398, 8
          %s400 = scalar_lea.vmem %s0, %s399
        $region24: #{tpu_custom_call.1} parent=19 // pred_fallthru
          _
        // Predicated region
        $region25: #{tpu_custom_call.1} parent=19 // pred_check
          %p401 = pneg %p83
        $region26: #{tpu_custom_call.1} parent=19 // pred_check_branch
          %403 = sbr.rel (%p401) target = $region28
        $region27: #{tpu_custom_call.1} parent=19 // pred_region
          %p404 = scmp.lt.s32.totalorder %s32, 1
          %s405 = scalar_select %p404, %s32, 1
          %s406 = smul.addr %s405, 8
          %s407 = scalar_lea.vmem %s1, %s406
        $region28: #{tpu_custom_call.1} parent=19 // pred_fallthru
          _
        // Predicated region
        $region29: #{tpu_custom_call.1} parent=19 // pred_check
          %p408 = pneg %p109
        $region30: #{tpu_custom_call.1} parent=19 // pred_check_branch
          %410 = sbr.rel (%p408) target = $region32
        $region31: #{tpu_custom_call.1} parent=19 // pred_region
          %p411 = scmp.lt.s32.totalorder %s32, 1
          %s412 = scalar_select %p411, %s32, 1
          %s413 = smul.addr %s412, 8
          %s414 = scalar_lea.vmem %s2, %s413
        $region32: #{tpu_custom_call.1} parent=19 // pred_fallthru
          _
        // Predicated region
        $region33: #{tpu_custom_call.1} parent=19 // pred_check
          %p415 = pneg %p135
        $region34: #{tpu_custom_call.1} parent=19 // pred_check_branch
          %417 = sbr.rel (%p415) target = $region36
        $region35: #{tpu_custom_call.1} parent=19 // pred_region
          %p418 = scmp.lt.s32.totalorder %s33, 3
          %s419 = scalar_select %p418, %s33, 3
          %s420 = smul.addr %s419, 4
          %s421 = smul.addr %s420, 8
          %s422 = scalar_lea.vmem %s3, %s421
        $region36: #{tpu_custom_call.1} parent=19 // pred_fallthru
          _
        // Predicated region
        $region37: #{tpu_custom_call.1} parent=19 // pred_check
          %p423 = pneg %p161
        $region38: #{tpu_custom_call.1} parent=19 // pred_check_branch
          %425 = sbr.rel (%p423) target = $region40
        $region39: #{tpu_custom_call.1} parent=19 // pred_region
          %p426 = scmp.lt.s32.totalorder %s33, 3
          %s427 = scalar_select %p426, %s33, 3
          %s428 = scalar_lea.vmem %s4, %s427
        $region40: #{tpu_custom_call.1} parent=19 // pred_fallthru
          _
        // Predicated region
        $region41: #{tpu_custom_call.1} parent=19 // pred_check
          %p429 = pneg %p187
        $region42: #{tpu_custom_call.1} parent=19 // pred_check_branch
          %431 = sbr.rel (%p429) target = $region44
        $region43: #{tpu_custom_call.1} parent=19 // pred_region
          %p432 = scmp.lt.s32.totalorder %s33, 3
          %s433 = scalar_select %p432, %s33, 3
          %s434 = smul.addr %s433, 4
          %s435 = smul.addr %s434, 8
          %s436 = scalar_lea.vmem %s5, %s435
        $region44: #{tpu_custom_call.1} parent=19 // pred_fallthru
          _
        // Predicated region
        $region45: #{tpu_custom_call.1} parent=19 // pred_check
          %p437 = pneg %p213
        $region46: #{tpu_custom_call.1} parent=19 // pred_check_branch
          %439 = sbr.rel (%p437) target = $region48
        $region47: #{tpu_custom_call.1} parent=19 // pred_region
          %p440 = scmp.lt.s32.totalorder %s33, 3
          %s441 = scalar_select %p440, %s33, 3
          %s442 = scalar_lea.vmem %s6, %s441
        $region48: #{tpu_custom_call.1} parent=19 // pred_fallthru
          _
        // Predicated region
        $region49: #{tpu_custom_call.1} parent=19 // pred_check
          %p443 = pneg %p239
        $region50: #{tpu_custom_call.1} parent=19 // pred_check_branch
          %445 = sbr.rel (%p443) target = $region52
        $region51: #{tpu_custom_call.1} parent=19 // pred_region
          %p446 = scmp.lt.s32.totalorder %s33, 3
          %s447 = scalar_select %p446, %s33, 3
          %s448 = smul.addr %s447, 4
          %s449 = smul.addr %s448, 8
          %s450 = scalar_lea.vmem %s7, %s449
        $region52: #{tpu_custom_call.1} parent=19 // pred_fallthru
          _
        // Predicated region
        $region53: #{tpu_custom_call.1} parent=19 // pred_check
          %p451 = pneg %p265
        $region54: #{tpu_custom_call.1} parent=19 // pred_check_branch
          %453 = sbr.rel (%p451) target = $region56
        $region55: #{tpu_custom_call.1} parent=19 // pred_region
          %p454 = scmp.lt.s32.totalorder %s33, 3
          %s455 = scalar_select %p454, %s33, 3
          %s456 = scalar_lea.vmem %s8, %s455
        $region56: #{tpu_custom_call.1} parent=19 // pred_fallthru
          _
        // Predicated region
        $region57: #{tpu_custom_call.1} parent=19 // pred_check
          %p457 = pneg %p291
        $region58: #{tpu_custom_call.1} parent=19 // pred_check_branch
          %459 = sbr.rel (%p457) target = $region60
        $region59: #{tpu_custom_call.1} parent=19 // pred_region
          %p460 = scmp.lt.s32.totalorder %s33, 3
          %s461 = scalar_select %p460, %s33, 3
          %s462 = smul.addr %s461, 8
          %s463 = scalar_lea.vmem %s9, %s462
        $region60: #{tpu_custom_call.1} parent=19 // pred_fallthru
          _
      $region20: #{tpu_custom_call.1} parent=5 // pred_fallthru
        _
      %p464 = scmp.le.s32.totalorder 1, %s25
      %p465 = scmp.lt.s32.totalorder %s25, 9
      %p466 = pnand %p464, %p465
      %p467 = pneg %p466
      // Predicated region
      $region61: #{tpu_custom_call.1} parent=5 // pred_check
        _
      $region62: #{tpu_custom_call.1} parent=5 // pred_check_branch
        %469 = sbr.rel (%p466) target = $region64
      $region63: #{tpu_custom_call.1} parent=5 // pred_region
        %s470 = ssub.s32 %s25, 1
        %p471 = scmp.lt.s32.totalorder %s34, 1
        %s472 = scalar_select %p471, %s34, 1
        %s473 = smul.addr %s472, 8
        %s474 = scalar_lea.vmem %s0, %s473
        %p475 = pneg %p63
        %p476 = pneg %p60
        %p477 = scmp.lt.s32.totalorder %s34, 1
        %s478 = scalar_select %p477, %s34, 1
        %s479 = smul.addr %s478, 8
        %s480 = scalar_lea.vmem %s1, %s479
        %p481 = pneg %p89
        %p482 = pneg %p86
        %p483 = scmp.lt.s32.totalorder %s34, 1
        %s484 = scalar_select %p483, %s34, 1
        %s485 = smul.addr %s484, 8
        %s486 = scalar_lea.vmem %s2, %s485
        %p487 = pneg %p115
        %p488 = pneg %p112
        %p489 = scmp.lt.s32.totalorder %s35, 3
        %s490 = scalar_select %p489, %s35, 3
        %s491 = smul.addr %s490, 4
        %s492 = smul.addr %s491, 8
        %s493 = scalar_lea.vmem %s3, %s492
        %p494 = pneg %p141
        %p495 = pneg %p138
        %p496 = scmp.lt.s32.totalorder %s35, 3
        %s497 = scalar_select %p496, %s35, 3
        %s498 = scalar_lea.vmem %s4, %s497
        %p499 = pneg %p167
        %p500 = pneg %p164
        %p501 = scmp.lt.s32.totalorder %s35, 3
        %s502 = scalar_select %p501, %s35, 3
        %s503 = smul.addr %s502, 4
        %s504 = smul.addr %s503, 8
        %s505 = scalar_lea.vmem %s5, %s504
        %p506 = pneg %p193
        %p507 = pneg %p190
        %p508 = scmp.lt.s32.totalorder %s35, 3
        %s509 = scalar_select %p508, %s35, 3
        %s510 = scalar_lea.vmem %s6, %s509
        %p511 = pneg %p219
        %p512 = pneg %p216
        %p513 = scmp.lt.s32.totalorder %s35, 3
        %s514 = scalar_select %p513, %s35, 3
        %s515 = smul.addr %s514, 4
        %s516 = smul.addr %s515, 8
        %s517 = scalar_lea.vmem %s7, %s516
        %p518 = pneg %p245
        %p519 = pneg %p242
        %p520 = scmp.lt.s32.totalorder %s35, 3
        %s521 = scalar_select %p520, %s35, 3
        %s522 = scalar_lea.vmem %s8, %s521
        %p523 = pneg %p271
        %p524 = pneg %p268
        %p525 = scmp.lt.s32.totalorder %s35, 3
        %s526 = scalar_select %p525, %s35, 3
        %s527 = smul.addr %s526, 8
        %s528 = scalar_lea.vmem %s9, %s527
        %p529 = pneg %p297
        %p530 = pneg %p294
        %p531 = pneg %p318
        %p532 = pneg %p315
        %p533 = pneg %p344
        %p534 = pneg %p341
        %s535 = sand.u32 %s331, 1
        %s536 = scalar_lea.sflag [#allocation4], %s535
        %s537 = sand.u32 %s331, 1
        %s538 = smul.addr %s537, 8
        %s539 = scalar_lea.vmem [#allocation3], %s538
        %p540 = pneg %p372
        %p541 = pneg %p369
        %s542 = sand.u32 %s359, 1
        %s543 = scalar_lea.sflag [#allocation6], %s542
        %s544 = sand.u32 %s359, 1
        %s545 = smul.addr %s544, 8
        %s546 = scalar_lea.vmem [#allocation5], %s545
        %p547 = scmp.lt.s32.totalorder %s34, 1
        %s548 = scalar_select %p547, %s34, 1
        %s549 = smul.addr %s548, 8
        %s550 = scalar_lea.vmem %s0, %s549
        %p551 = scmp.lt.s32.totalorder %s34, 1
        %s552 = scalar_select %p551, %s34, 1
        %s553 = smul.addr %s552, 8
        %s554 = scalar_lea.vmem %s1, %s553
        %p555 = scmp.lt.s32.totalorder %s34, 1
        %s556 = scalar_select %p555, %s34, 1
        %s557 = smul.addr %s556, 8
        %s558 = scalar_lea.vmem %s2, %s557
        %p559 = scmp.lt.s32.totalorder %s35, 3
        %s560 = scalar_select %p559, %s35, 3
        %s561 = smul.addr %s560, 4
        %s562 = smul.addr %s561, 8
        %s563 = scalar_lea.vmem %s3, %s562
        %p564 = scmp.lt.s32.totalorder %s35, 3
        %s565 = scalar_select %p564, %s35, 3
        %s566 = scalar_lea.vmem %s4, %s565
        %p567 = scmp.lt.s32.totalorder %s35, 3
        %s568 = scalar_select %p567, %s35, 3
        %s569 = smul.addr %s568, 4
        %s570 = smul.addr %s569, 8
        %s571 = scalar_lea.vmem %s5, %s570
        %p572 = scmp.lt.s32.totalorder %s35, 3
        %s573 = scalar_select %p572, %s35, 3
        %s574 = scalar_lea.vmem %s6, %s573
        %p575 = scmp.lt.s32.totalorder %s35, 3
        %s576 = scalar_select %p575, %s35, 3
        %s577 = smul.addr %s576, 4
        %s578 = smul.addr %s577, 8
        %s579 = scalar_lea.vmem %s7, %s578
        %p580 = scmp.lt.s32.totalorder %s35, 3
        %s581 = scalar_select %p580, %s35, 3
        %s582 = scalar_lea.vmem %s8, %s581
        %p583 = scmp.lt.s32.totalorder %s35, 3
        %s584 = scalar_select %p583, %s35, 3
        %s585 = smul.addr %s584, 8
        %s586 = scalar_lea.vmem %s9, %s585
        %v587 = vld [vmem:[%s550] sm:$0xff]
        %v588 = vld [vmem:[%s563] sm:$0xff]
        %v589 = vld [vmem:[%s563 + $0x8] sm:$0xff]
        %v590 = vld [vmem:[%s563 + $0x10] sm:$0xff]
        %v591 = vld [vmem:[%s563 + $0x18] sm:$0xff]
        %v592 = vld [vmem:[%s566] sm:$0x1]
        %v594 = vperm.slane %v592, 0
        %vm596 = vcmask 261120
        %v598 = vsel %vm596, %v587, 0
        %600 = vmatpush.msra.mxu0 0.0
        %601 = vmatpush.msra.mxu0 0.0
        %602 = vmatpush.msra.mxu0 0.0
        %603 = vmatpush.msra.mxu0 0.0
        %604 = vmatpush.msra.mxu0 0.0
        %605 = vmatpush.msra.mxu0 0.0
        %606 = vmatpush.msra.mxu0 0.0
        %607 = vmatpush.msra.mxu0 0.0
        %608 = vmatpush.msra.mxu0 0.0
        %609 = vmatpush.msra.mxu0 0.0
        %610 = vmatpush.msra.mxu0 0.0
        %611 = vmatpush.msra.mxu0 0.0
        %612 = vmatpush.msra.mxu0 %v591
        %613 = vmatpush.msra.mxu0 %v590
        %614 = vmatpush.msra.mxu0 %v589
        %615 = vmatpush.msra.mxu0 %v588
        %616 = vmatmul.f32.gmra.mxu0 %v598
        %v617 = vpop.f32.mrf.mxu0
        %v618 = vadd.f32 %v594, %v617
        %619 = vdwg.mxu0
        %v620 = vld [vmem:[%s554] sm:$0xff]
        %v621 = vld [vmem:[%s571] sm:$0xff]
        %v622 = vld [vmem:[%s571 + $0x8] sm:$0xff]
        %v623 = vld [vmem:[%s571 + $0x10] sm:$0xff]
        %v624 = vld [vmem:[%s571 + $0x18] sm:$0xff]
        %v625 = vld [vmem:[%s574] sm:$0x1]
        %v627 = vperm.slane %v625, 0
        %v630 = vsel %vm596, %v620, 0
        %632 = vmatpush.msra.mxu0 0.0
        %633 = vmatpush.msra.mxu0 0.0
        %634 = vmatpush.msra.mxu0 0.0
        %635 = vmatpush.msra.mxu0 0.0
        %636 = vmatpush.msra.mxu0 0.0
        %637 = vmatpush.msra.mxu0 0.0
        %638 = vmatpush.msra.mxu0 0.0
        %639 = vmatpush.msra.mxu0 0.0
        %640 = vmatpush.msra.mxu0 0.0
        %641 = vmatpush.msra.mxu0 0.0
        %642 = vmatpush.msra.mxu0 0.0
        %643 = vmatpush.msra.mxu0 0.0
        %644 = vmatpush.msra.mxu0 %v624
        %645 = vmatpush.msra.mxu0 %v623
        %646 = vmatpush.msra.mxu0 %v622
        %647 = vmatpush.msra.mxu0 %v621
        %648 = vmatmul.f32.gmra.mxu0 %v630
        %v649 = vpop.f32.mrf.mxu0
        %v650 = vadd.f32 %v627, %v649
        %651 = vdwg.mxu0
        %v652 = vld [vmem:[%s558] sm:$0xff]
        %v653 = vld [vmem:[%s579] sm:$0xff]
        %v654 = vld [vmem:[%s579 + $0x8] sm:$0xff]
        %v655 = vld [vmem:[%s579 + $0x10] sm:$0xff]
        %v656 = vld [vmem:[%s579 + $0x18] sm:$0xff]
        %v657 = vld [vmem:[%s582] sm:$0x1]
        %v659 = vperm.slane %v657, 0
        %v662 = vsel %vm596, %v652, 0
        %664 = vmatpush.msra.mxu0 0.0
        %665 = vmatpush.msra.mxu0 0.0
        %666 = vmatpush.msra.mxu0 0.0
        %667 = vmatpush.msra.mxu0 0.0
        %668 = vmatpush.msra.mxu0 0.0
        %669 = vmatpush.msra.mxu0 0.0
        %670 = vmatpush.msra.mxu0 0.0
        %671 = vmatpush.msra.mxu0 0.0
        %672 = vmatpush.msra.mxu0 0.0
        %673 = vmatpush.msra.mxu0 0.0
        %674 = vmatpush.msra.mxu0 0.0
        %675 = vmatpush.msra.mxu0 0.0
        %676 = vmatpush.msra.mxu0 %v656
        %677 = vmatpush.msra.mxu0 %v655
        %678 = vmatpush.msra.mxu0 %v654
        %679 = vmatpush.msra.mxu0 %v653
        %680 = vmatmul.f32.gmra.mxu0 %v662
        %v681 = vpop.f32.mrf.mxu0
        %v682 = vadd.f32 %v659, %v681
        %683 = vdwg.mxu0
        %vm684 = vcmask 64512
        %v686 = vsel %vm684, %v618, 0
        %v689 = vsel %vm684, %v650, 0
        %691 = vmatpush.xpose.msra.mxu0 0.0
        %692 = vmatpush.xpose.msra.mxu0 0.0
        %693 = vmatpush.xpose.msra.mxu0 0.0
        %694 = vmatpush.xpose.msra.mxu0 0.0
        %695 = vmatpush.xpose.msra.mxu0 0.0
        %696 = vmatpush.xpose.msra.mxu0 0.0
        %697 = vmatpush.xpose.msra.mxu0 0.0
        %698 = vmatpush.xpose.msra.mxu0 0.0
        %699 = vmatpush.xpose.msra.mxu0 0.0
        %700 = vmatpush.xpose.msra.mxu0 0.0
        %701 = vmatpush.xpose.msra.mxu0 0.0
        %702 = vmatpush.xpose.msra.mxu0 0.0
        %703 = vmatpush.xpose.msra.mxu0 0.0
        %704 = vmatpush.xpose.msra.mxu0 0.0
        %705 = vmatpush.xpose.msra.mxu0 0.0
        %706 = vmatpush.xpose.msra.mxu0 %v689
        %707 = vmatmul.f32.gmra.mxu0 %v686
        %v708 = vpop.f32.mrf.mxu0
        %v709 = vadd.f32 0.0, %v708
        %710 = vdwg.mxu0
        %v711 = vsel %vm684, %v709, -inf
        %712 = vmax.xlane.f32.xlu0 %v711
        %v713 = vpop.xlane.xlu0 %712
        %v714 = vsub.f32 %v709, %v713
        %v715 = vmul.f32 %v714, 1.442695
        %v716 = vpow.pop %v715
        %v717 = vsel %vm684, %v716, 0.0
        %718 = vadd.xlane.f32.xlu0 %v717
        %v719 = vpop.xlane.xlu0 %718
        %v720 = vrcp.pop %v719
        %v721 = vmul.f32 %v719, %v720
        %v722 = vsub.f32 2.0, %v721
        %v723 = vmul.f32 %v720, %v722
        %v724 = vmul.f32 %v716, %v723
        %725 = vst.msk [vmem:[%s546] sm:$0xff] %vm684, %v724
        %v727 = vsel %vm684, %v724, 0
        %729 = vmatpush.msra.mxu0 0.0
        %730 = vmatpush.msra.mxu0 0.0
        %731 = vmatpush.msra.mxu0 0.0
        %732 = vmatpush.msra.mxu0 0.0
        %733 = vmatpush.msra.mxu0 0.0
        %734 = vmatpush.msra.mxu0 0.0
        %735 = vmatpush.msra.mxu0 0.0
        %736 = vmatpush.msra.mxu0 0.0
        %737 = vmatpush.msra.mxu0 0.0
        %738 = vmatpush.msra.mxu0 0.0
        %739 = vmatpush.msra.mxu0 0.0
        %740 = vmatpush.msra.mxu0 0.0
        %741 = vmatpush.msra.mxu0 0.0
        %742 = vmatpush.msra.mxu0 0.0
        %743 = vmatpush.msra.mxu0 0.0
        %744 = vmatpush.msra.mxu0 %v682
        %745 = vmatmul.f32.gmra.mxu0 %v727
        %v746 = vpop.f32.mrf.mxu0
        %v747 = vadd.f32 0.0, %v746
        %748 = vdwg.mxu0
        %p749 = scmp.eq.s32.totalorder %s35, 0
        // Predicated region
        $region65: #{tpu_custom_call.1} parent=63 // pred_check
          %p750 = pneg %p749
        $region66: #{tpu_custom_call.1} parent=63 // pred_check_branch
          %752 = sbr.rel (%p750) target = $region68
        $region67: #{tpu_custom_call.1} parent=63 // pred_region
          %753 = vst.msk [vmem:[#allocation2] sm:$0xff] %vm596, 0.0
        $region68: #{tpu_custom_call.1} parent=63 // pred_fallthru
          _
        %v754 = vld [vmem:[#allocation2] sm:$0xff]
        %v755 = vld [vmem:[%s586] sm:$0xff]
        %v757 = vsel %vm684, %v747, 0
        %759 = vmatpush.msra.mxu0 0.0
        %760 = vmatpush.msra.mxu0 0.0
        %761 = vmatpush.msra.mxu0 0.0
        %762 = vmatpush.msra.mxu0 0.0
        %763 = vmatpush.msra.mxu0 0.0
        %764 = vmatpush.msra.mxu0 0.0
        %765 = vmatpush.msra.mxu0 0.0
        %766 = vmatpush.msra.mxu0 0.0
        %767 = vmatpush.msra.mxu0 0.0
        %768 = vmatpush.msra.mxu0 0.0
        %769 = vmatpush.msra.mxu0 0.0
        %770 = vmatpush.msra.mxu0 0.0
        %771 = vmatpush.msra.mxu0 0.0
        %772 = vmatpush.msra.mxu0 0.0
        %773 = vmatpush.msra.mxu0 0.0
        %774 = vmatpush.msra.mxu0 %v755
        %775 = vmatmul.f32.gmra.mxu0 %v757
        %v776 = vpop.f32.mrf.mxu0
        %v777 = vadd.f32 0.0, %v776
        %778 = vdwg.mxu0
        %v779 = vadd.f32 %v754, %v777
        %780 = vst.msk [vmem:[#allocation2] sm:$0xff] %vm596, %v779
        %p781 = scmp.eq.s32.totalorder %s35, 3
        // Predicated region
        $region69: #{tpu_custom_call.1} parent=63 // pred_check
          %p782 = pneg %p781
        $region70: #{tpu_custom_call.1} parent=63 // pred_check_branch
          %784 = sbr.rel (%p782) target = $region72
        $region71: #{tpu_custom_call.1} parent=63 // pred_region
          %v785 = vld [vmem:[#allocation2] sm:$0xff]
          %v786 = vld [vmem:[%s10] sm:$0x1]
          %v788 = vperm.slane %v786, 0
          %v790 = vadd.f32 %v785, %v788
          %791 = vst.msk [vmem:[%s539] sm:$0xff] %vm596, %v790
        $region72: #{tpu_custom_call.1} parent=63 // pred_fallthru
          _
        %s792 = sand.u32 %s331, 1
        %s793 = scalar_lea.sflag [#allocation4], %s792
        %s794 = sand.u32 %s331, 1
        %s795 = smul.addr %s794, 8
        %s796 = scalar_lea.vmem [#allocation3], %s795
        %s797 = sand.u32 %s359, 1
        %s798 = scalar_lea.sflag [#allocation6], %s797
        %s799 = sand.u32 %s359, 1
        %s800 = smul.addr %s799, 8
        %s801 = scalar_lea.vmem [#allocation5], %s800
        // Predicated region
        $region73: #{tpu_custom_call.1} parent=63 // pred_check
          %p802 = pneg %p341
        $region74: #{tpu_custom_call.1} parent=63 // pred_check_branch
          %804 = sbr.rel (%p802) target = $region76
        $region75: #{tpu_custom_call.1} parent=63 // pred_region
          %806 = vsyncadd %s793, 0
          %s807 = smul.addr %s34, 8
          %s808 = scalar_lea.hbm %s11, %s807
          %s810 = sshll.u32 %s796, 4
          %s811 = int_to_ptr.vmem [resolvable:$true] %s810
          %s812 = sshll.u32 %s808, 4
          %s813 = int_to_ptr.hbm [resolvable:$true] %s812
          %815 = dma.vmem_to_hbm [thread:$0]  %s811, 128, %s813, %s793
        $region76: #{tpu_custom_call.1} parent=63 // pred_fallthru
          _
        // Predicated region
        $region77: #{tpu_custom_call.1} parent=63 // pred_check
          %p816 = pneg %p369
        $region78: #{tpu_custom_call.1} parent=63 // pred_check_branch
          %818 = sbr.rel (%p816) target = $region80
        $region79: #{tpu_custom_call.1} parent=63 // pred_region
          %820 = vsyncadd %s798, 0
          %s821 = smul.addr %s34, 4
          %s822 = sadd.s32 %s35, %s821
          %s823 = smul.addr %s822, 8
          %s824 = scalar_lea.hbm %s12, %s823
          %s826 = sshll.u32 %s801, 4
          %s827 = int_to_ptr.vmem [resolvable:$true] %s826
          %s828 = sshll.u32 %s824, 4
          %s829 = int_to_ptr.hbm [resolvable:$true] %s828
          %831 = dma.vmem_to_hbm [thread:$0]  %s827, 128, %s829, %s798
        $region80: #{tpu_custom_call.1} parent=63 // pred_fallthru
          _
      $region64: #{tpu_custom_call.1} parent=5 // pred_fallthru
        _
      %p832 = scmp.le.s32.totalorder 2, %s25
      // Predicated region
      $region81: #{tpu_custom_call.1} parent=5 // pred_check
        %p833 = pneg %p832
      $region82: #{tpu_custom_call.1} parent=5 // pred_check_branch
        %835 = sbr.rel (%p833) target = $region84
      $region83: #{tpu_custom_call.1} parent=5 // pred_region
        %s836 = ssub.s32 %s25, 2
        // Predicated region
        $region85: #{tpu_custom_call.1} parent=83 // pred_check
          %p837 = pneg %p347
        $region86: #{tpu_custom_call.1} parent=83 // pred_check_branch
          %839 = sbr.rel (%p837) target = $region88
        $region87: #{tpu_custom_call.1} parent=83 // pred_region
          %s840 = sand.u32 %s332, 1
          %s841 = scalar_lea.sflag [#allocation4], %s840
          %s842 = sand.u32 %s332, 1
          %s843 = smul.addr %s842, 8
          %s844 = scalar_lea.vmem [#allocation3], %s843
          %846 = dma.done %s841, 128
        $region88: #{tpu_custom_call.1} parent=83 // pred_fallthru
          _
        // Predicated region
        $region89: #{tpu_custom_call.1} parent=83 // pred_check
          %p847 = pneg %p375
        $region90: #{tpu_custom_call.1} parent=83 // pred_check_branch
          %849 = sbr.rel (%p847) target = $region92
        $region91: #{tpu_custom_call.1} parent=83 // pred_region
          %s850 = sand.u32 %s360, 1
          %s851 = scalar_lea.sflag [#allocation6], %s850
          %s852 = sand.u32 %s360, 1
          %s853 = smul.addr %s852, 8
          %s854 = scalar_lea.vmem [#allocation5], %s853
          %856 = dma.done %s851, 128
        $region92: #{tpu_custom_call.1} parent=83 // pred_fallthru
          _
      $region84: #{tpu_custom_call.1} parent=5 // pred_fallthru
        _
    $region6: #{tpu_custom_call.1} parent=1 // loop_footer
      %s29 = sadd.s32 1, %s25
    $region7: #{tpu_custom_call.1} parent=1 // loop_footer_branch
      %24 = sbr.rel target = $region3
    $region8: #{tpu_custom_call.1} parent=1 // loop_exit
      _
    %857 = vsyncpa [#allocation4], 1
    %s858 = scalar_lea.sflag [#allocation4], 1
    %859 = vsyncpa %s858, 1
    %860 = vsyncpa [#allocation6], 1
    %s861 = scalar_lea.sflag [#allocation6], 1
    %862 = vsyncpa %s861, 1

</llo_original>
